<compile_context>
chip_gen: v7x
topology: tpu7x:2x2x1
jax: 0.10.0
libtpu: 0.0.40
codegen_flags: <defaults>
</compile_context>

<pallas_src>
import numpy as np
import jax
import jax.numpy as jnp
from jax import lax
from jax.experimental import pallas as pl
from jax.experimental.pallas import tpu as pltpu


def _round_up(x, m):
    return (x + m - 1) // m * m


# ---------------------------------------------------------------------------
# Kernel 1: tiled dense matmul  h = x @ W   (MXU, K-axis accumulation)
# ---------------------------------------------------------------------------
def _matmul_kernel(x_ref, w_ref, o_ref, acc_ref):
    @pl.when(pl.program_id(2) == 0)
    def _():
        acc_ref[...] = jnp.zeros_like(acc_ref)

    acc_ref[...] += jnp.dot(x_ref[...], w_ref[...],
                            preferred_element_type=jnp.float32)

    @pl.when(pl.program_id(2) == pl.num_programs(2) - 1)
    def _():
        o_ref[...] = acc_ref[...].astype(o_ref.dtype)


def pallas_matmul_padded(x, w, *, tm=256, tn=128, tk=256,
                         vmem_limit_bytes=48 * 1024 * 1024):
    """x:(M,K), w:(K,F) -> zero-padded (M_pad, F_pad) f32 product."""
    m, k = x.shape
    k2, f = w.shape
    assert k == k2
    assert tm % 8 == 0 and tn % 128 == 0 and tk % 8 == 0
    m_pad = _round_up(m, tm)
    k_pad = _round_up(k, tk)
    f_pad = _round_up(f, tn)          # lane-dense (>=128-aligned) output columns

    x_p = jnp.zeros((m_pad, k_pad), jnp.float32).at[:m, :k].set(
        x.astype(jnp.float32))
    w_p = jnp.zeros((k_pad, f_pad), jnp.float32).at[:k, :f].set(
        w.astype(jnp.float32))
    # TODO(synk): on v6e cast x_p / w_p to bfloat16 (keep f32 accumulation) for
    # full MXU throughput and halve downstream gather traffic; kept f32 so the
    # demo reference check stays tight.

    return pl.pallas_call(
        _matmul_kernel,
        out_shape=jax.ShapeDtypeStruct((m_pad, f_pad), jnp.float32),
        grid_spec=pltpu.PrefetchScalarGridSpec(
            num_scalar_prefetch=0,
            grid=(m_pad // tm, f_pad // tn, k_pad // tk),
            in_specs=[
                pl.BlockSpec((tm, tk), lambda i, j, kk: (i, kk)),
                pl.BlockSpec((tk, tn), lambda i, j, kk: (kk, j)),
            ],
            out_specs=pl.BlockSpec((tm, tn), lambda i, j, kk: (i, j)),
            scratch_shapes=[pltpu.VMEM((tm, tn), jnp.float32)],
        ),
        compiler_params=pltpu.CompilerParams(
            dimension_semantics=("parallel", "parallel", "arbitrary"),
            vmem_limit_bytes=vmem_limit_bytes),
    )(x_p, w_p)


# ---------------------------------------------------------------------------
# Kernel 2: fused neighbor-gather + masked lower-median + bias
#
#   nbr_ref : SMEM (N_pad*Dmax,) int32   flattened neighbor table (scalar prefetch)
#   deg_ref : VMEM (tile_n, 1)   int32   per-node neighbor count
#   bias_ref: VMEM (1, F)        f32
#   h_hbm   : HBM  (M_h, F)      f32     transformed features (memory_space=ANY)
#   out_ref : VMEM (tile_n, F)   f32
#   gbuf    : VMEM (2, tile_n//2, Dmax, F)  double-buffered gather scratch
#   sem     : DMA semaphores (2,)
#
# Each grid step handles tile_n nodes in two half-tiles: DMA-gather the
# neighbor rows of the next half while computing the median of the current one.
# The median is sort-free: rank(j) = (#strictly-less) + (#equal among earlier
# slots); padded slots are pushed to +inf via (iota_D >= deg) so they never win.
# ---------------------------------------------------------------------------
def _median_gather_kernel(nbr_ref, deg_ref, bias_ref, h_hbm, out_ref, gbuf, sem):
    tile = pl.program_id(0)
    n_half, d_max, f = gbuf.shape[1], gbuf.shape[2], gbuf.shape[3]
    tile_n = 2 * n_half

    def start_gather(half_idx, slot):
        flat_base = (tile * tile_n + half_idx * n_half) * d_max

        @pl.loop(0, n_half * d_max)
        def _(kk):
            row = nbr_ref[flat_base + kk]
            pltpu.make_async_copy(h_hbm.at[row],
                                  gbuf.at[slot, kk // d_max, kk % d_max],
                                  sem.at[slot]).start()

    def wait_gather(slot):
        @pl.loop(0, n_half * d_max)
        def _(kk):
            pltpu.make_async_copy(h_hbm.at[0],
                                  gbuf.at[slot, kk // d_max, kk % d_max],
                                  sem.at[slot]).wait()

    start_gather(0, 0)

    for hb in range(2):                 # two half-tiles, double buffered (static)
        slot = hb & 1
        if hb + 1 < 2:
            start_gather(hb + 1, 1 - slot)   # prefetch next half before waiting
        wait_gather(slot)

        vals = gbuf[slot]                                    # (half, Dmax, F)
        deg = deg_ref[pl.ds(hb * n_half, n_half), :]         # (half, 1) int32
        target = (deg - 1) // 2                              # lower-median rank
        d_iota = lax.broadcasted_iota(jnp.int32, (n_half, d_max, f), 1)
        big = jnp.where(d_iota < deg[:, :, None], vals, jnp.inf)

        med = jnp.zeros((n_half, f), dtype=jnp.float32)
        for j in range(d_max):          # Dmax is small & static -> unrolled
            vj = big[:, j, :]                                            # (half, F)
            less = jnp.sum((big < vj[:, None, :]).astype(jnp.int32), axis=1)
            eq_before = jnp.sum(((big == vj[:, None, :]) & (d_iota < j))
                                .astype(jnp.int32), axis=1)
            rank = less + eq_before                                      # (half, F)
            med = jnp.where(rank == target, vj, med)

        out_ref[pl.ds(hb * n_half, n_half), :] = (
            med + bias_ref[...]).astype(out_ref.dtype)


def pallas_median_aggregate(h_pad, nbr_idx, deg, bias, num_nodes, out_channels,
                            *, tile_n=256, vmem_limit_bytes=48 * 1024 * 1024):
    m_h, f_pad = h_pad.shape
    n, d_max = nbr_idx.shape
    assert tile_n % 16 == 0, "tile_n must split into 8-aligned half tiles"
    n_pad = _round_up(n, tile_n)
    n_half = tile_n // 2

    # Padded / flattened side tables (tiny compared with h).
    nbr = jnp.clip(nbr_idx.astype(jnp.int32), 0, m_h - 1)
    nbr_p = jnp.zeros((n_pad, d_max), jnp.int32).at[:n, :].set(nbr)
    nbr_flat = nbr_p.reshape(-1)          # 1-D -> tight SMEM padding
    deg_p = jnp.zeros((n_pad, 1), jnp.int32).at[:n, 0].set(deg.astype(jnp.int32))
    bias_p = jnp.zeros((1, f_pad), jnp.float32).at[0, :out_channels].set(
        bias.astype(jnp.float32))

    # TODO(synk): for very large graphs the whole neighbor table does not fit
    # SMEM; it would need per-tile blocking of the index table.  Row gathers are
    # one DMA descriptor per neighbor row; batch rows per descriptor if F is small.
    out = pl.pallas_call(
        _median_gather_kernel,
        out_shape=jax.ShapeDtypeStruct((n_pad, f_pad), jnp.float32),
        grid_spec=pltpu.PrefetchScalarGridSpec(
            num_scalar_prefetch=1,
            grid=(n_pad // tile_n,),
            in_specs=[
                pl.BlockSpec((tile_n, 1), lambda i, nbr: (i, 0)),    # deg
                pl.BlockSpec((1, f_pad), lambda i, nbr: (0, 0)),     # bias
                pl.BlockSpec(memory_space=pl.ANY),                   # h stays in HBM
            ],
            out_specs=pl.BlockSpec((tile_n, f_pad), lambda i, nbr: (i, 0)),
            scratch_shapes=[
                pltpu.VMEM((2, n_half, d_max, f_pad), jnp.float32),
                pltpu.SemaphoreType.DMA((2,)),
            ],
        ),
        compiler_params=pltpu.CompilerParams(
            dimension_semantics=("parallel",),
            vmem_limit_bytes=vmem_limit_bytes),
    )(nbr_flat, deg_p, bias_p, h_pad)

    return out[:num_nodes, :out_channels]


# ---------------------------------------------------------------------------
# MedianConvolution forward (Pallas)
# ---------------------------------------------------------------------------
def median_convolution(x, nbr_idx, deg, kernel, bias=None, *,
                       tm=256, tn=128, tk=256, tile_n=256):
    """x:(N,Cin) f32, nbr_idx:(N,Dmax) i32 (padded slots -> any valid index),
    deg:(N,) i32, kernel:(Cin,Cout), bias:(Cout,) or None.
    activation=None -> identity.  Nodes with deg==0 return bias (zeros)."""
    n = x.shape[0]
    cout = kernel.shape[1]
    if bias is None:
        bias = jnp.zeros((cout,), jnp.float32)
    h_pad = pallas_matmul_padded(x, kernel, tm=tm, tn=tn, tk=tk)   # (M_pad, F_pad)
    # Neighbor gather is fused into the median kernel (rows DMA'd straight from
    # h in HBM) -- no (N, Dmax, F) intermediate is ever materialized.
    return pallas_median_aggregate(h_pad, nbr_idx, deg, bias, n, cout,
                                   tile_n=tile_n)


# ---------------------------------------------------------------------------
if __name__ == "__main__":
    N, C_IN, C_OUT, D_MAX = 200, 192, 96, 7

    key = jax.random.PRNGKey(0)
    kx, kw = jax.random.split(key)
    x = jax.random.normal(kx, (N, C_IN), dtype=jnp.float32)
    # uniform() init for the kernel, zeros() for bias (per reset_parameters)
    W = jax.random.uniform(kw, (C_IN, C_OUT), dtype=jnp.float32,
                           minval=-0.25, maxval=0.25)
    bias = jnp.zeros((C_OUT,), jnp.float32)

    # Deterministic synthetic neighbor lists (variable degree, padded table + deg).
    degs = [1 + (i % D_MAX) for i in range(N)]
    nbr_idx_np = np.zeros((N, D_MAX), np.int32)
    for i in range(N):
        for j in range(degs[i]):
            nbr_idx_np[i, j] = (3 * i + 7 * j + 1) % N
    nbr_idx = jnp.asarray(nbr_idx_np)
    deg = jnp.asarray(np.asarray(degs, np.int32))

    # Small tiles in the demo so multiple grid steps / K-accumulation steps run.
    out = median_convolution(x, nbr_idx, deg, W, bias,
                             tm=128, tn=128, tk=128, tile_n=64)
    out = jax.block_until_ready(out)
    assert out.shape == (N, C_OUT)

    # Pure-numpy reference (torch.median = lower median).
    h_ref = np.asarray(x, np.float64) @ np.asarray(W, np.float64)
    ref_rows = []
    for i in range(N):
        nb = nbr_idx_np[i, :degs[i]]
        srt = np.sort(h_ref[nb], axis=0)
        ref_rows.append(srt[(degs[i] - 1) // 2])
    ref = np.stack(ref_rows) + np.asarray(bias, np.float64)

    np.testing.assert_allclose(np.asarray(out), ref, rtol=1e-4, atol=1e-4)
    print("KERNEL_OK")
</pallas_src>

<mosaic_0001>
module attributes {stable_mosaic.version = 11 : i64} {
  func.func @_matmul_kernel(%arg0: i32, %arg1: i32, %arg2: i32, %arg3: memref<128x128xf32, #tpu.memory_space<vmem>>, %arg4: memref<128x128xf32, #tpu.memory_space<vmem>>, %arg5: memref<128x128xf32, #tpu.memory_space<vmem>>, %arg6: memref<128x128xf32, #tpu.memory_space<vmem>>) attributes {dimension_semantics = [#tpu.dimension_semantics<parallel>, #tpu.dimension_semantics<parallel>, #tpu.dimension_semantics<arbitrary>], iteration_bounds = array<i64: 2, 1, 2>, scalar_prefetch = 0 : i64, scratch_operands = 1 : i64, tpu.core_type = #tpu.core_type<tc>, window_params = [{transform_indices = @transform_0, window_bounds = array<i64: 128, 128>}, {transform_indices = @transform_1, window_bounds = array<i64: 128, 128>}, {transform_indices = @transform_2, window_bounds = array<i64: 128, 128>}]} {
    %c0_i32 = arith.constant 0 : i32
    %0 = arith.cmpi eq, %arg2, %c0_i32 : i32
    %1 = arith.extui %0 : i1 to i32
    %c0_i32_0 = arith.constant 0 : i32
    %2 = arith.cmpi ne, %1, %c0_i32_0 : i32
    scf.if %2 {
      %cst_9 = arith.constant 0.000000e+00 : f32
      %12 = vector.broadcast %cst_9 : f32 to vector<128x128xf32>
      %c0_10 = arith.constant 0 : index
      %c0_11 = arith.constant 0 : index
      %13 = vector.load %arg6[%c0_10, %c0_11] : memref<128x128xf32, #tpu.memory_space<vmem>>, vector<128x128xf32>
      tpu.vector_store %arg6[%c0_10, %c0_11], %12 {strides = array<i32>} : memref<128x128xf32, #tpu.memory_space<vmem>>, vector<128x128xf32>,
    } else {
    }
    %c0 = arith.constant 0 : index
    %c0_1 = arith.constant 0 : index
    %3 = vector.load %arg6[%c0, %c0_1] : memref<128x128xf32, #tpu.memory_space<vmem>>, vector<128x128xf32>
    %c0_2 = arith.constant 0 : index
    %c0_3 = arith.constant 0 : index
    %4 = vector.load %arg3[%c0_2, %c0_3] : memref<128x128xf32, #tpu.memory_space<vmem>>, vector<128x128xf32>
    %c0_4 = arith.constant 0 : index
    %c0_5 = arith.constant 0 : index
    %5 = vector.load %arg4[%c0_4, %c0_5] : memref<128x128xf32, #tpu.memory_space<vmem>>, vector<128x128xf32>
    %cst = arith.constant dense<0.000000e+00> : vector<128x128xf32>
    %6 = tpu.matmul %4, %5, %cst {dimension_numbers = #tpu.dot_dimension_numbers<[1], [0], [0], [1], [0, 0, 1, 1], [], []>} : vector<128x128xf32>, vector<128x128xf32>, vector<128x128xf32> -> vector<128x128xf32>
    %7 = arith.addf %3, %6 : vector<128x128xf32>
    %c0_6 = arith.constant 0 : index
    %c0_7 = arith.constant 0 : index
    %8 = vector.load %arg6[%c0_6, %c0_7] : memref<128x128xf32, #tpu.memory_space<vmem>>, vector<128x128xf32>
    tpu.vector_store %arg6[%c0_6, %c0_7], %7 {strides = array<i32>} : memref<128x128xf32, #tpu.memory_space<vmem>>, vector<128x128xf32>,
    %c1_i32 = arith.constant 1 : i32
    %9 = arith.cmpi eq, %arg2, %c1_i32 : i32
    %10 = arith.extui %9 : i1 to i32
    %c0_i32_8 = arith.constant 0 : i32
    %11 = arith.cmpi ne, %10, %c0_i32_8 : i32
    scf.if %11 {
      %c0_9 = arith.constant 0 : index
      %c0_10 = arith.constant 0 : index
      %12 = vector.load %arg6[%c0_9, %c0_10] : memref<128x128xf32, #tpu.memory_space<vmem>>, vector<128x128xf32>
      %c0_11 = arith.constant 0 : index
      %c0_12 = arith.constant 0 : index
      %13 = vector.load %arg5[%c0_11, %c0_12] : memref<128x128xf32, #tpu.memory_space<vmem>>, vector<128x128xf32>
      tpu.vector_store %arg5[%c0_11, %c0_12], %12 {strides = array<i32>} : memref<128x128xf32, #tpu.memory_space<vmem>>, vector<128x128xf32>,
    } else {
    }
    return
  }
  func.func @transform_0(%arg0: i32, %arg1: i32, %arg2: i32) -> (i32, i32) {
    %c0_i32 = arith.constant 0 : i32
    return %arg0, %arg2 : i32, i32
  }
  func.func @transform_1(%arg0: i32, %arg1: i32, %arg2: i32) -> (i32, i32) {
    %c0_i32 = arith.constant 0 : i32
    return %arg2, %arg1 : i32, i32
  }
  func.func @transform_2(%arg0: i32, %arg1: i32, %arg2: i32) -> (i32, i32) {
    %c0_i32 = arith.constant 0 : i32
    return %arg0, %arg1 : i32, i32
  }
}

</mosaic_0001>

<llo_original>
// kernel: tpu_custom_call.1
$region0: #{tpu_custom_call.1}
  #allocation0 [shape = 'u32[]', space=smem, size = 0x4, offset = 0x4, fixed_abs, tag = 'smem constant byte address 0x4 - core index']
  #allocation1 [shape = 'u32[144,128]{1,0:T(1,128)}', space=vmem, size = 0x12000, scoped, tag = 'internal scratch']
  #allocation2 [shape = 'f32[128,128]{1,0:T(8,128)}', space=vmem, size = 0x10000, scoped, tag = 'scratch operand']
  %s0 = inlined_call_operand.hbm [shape: f32[256,256], index: 0, kind: input, shape index: {}]
  %s1 = inlined_call_operand.hbm [shape: f32[256,128], index: 1, kind: input, shape index: {}]
  %s2 = inlined_call_operand.hbm [shape: f32[256,128], index: 2, kind: output, shape index: {}]
  %s3 = sld [smem:[#allocation0]]
  $region57: #{tpu_custom_call.1} parent=0
    _
  %s5 = ssub.s32 1, %s3
  %s6 = scalar_select 0, %s5, %s3
  $region1: #{tpu_custom_call.1} parent=0
    #allocation3 [shape = 'u8[131072]{0}', space=vmem, size = 0x20000, scoped, tag = 'input window, operand 0']
    #allocation4 [shape = 's32[2]{0}', space=sflag, size = 0x8, scoped, tag = 'scoped memory for tpu_custom_call.1']
    #allocation5 [shape = 's32[2]{0}', space=sflag, size = 0x8, scoped, tag = 'scoped memory for tpu_custom_call.1']
    #allocation6 [shape = 'u8[131072]{0}', space=vmem, size = 0x20000, scoped, tag = 'input window, operand 1']
    #allocation7 [shape = 's32[2]{0}', space=sflag, size = 0x8, scoped, tag = 'scoped memory for tpu_custom_call.1']
    #allocation8 [shape = 'u8[131072]{0}', space=vmem, size = 0x20000, scoped, tag = 'output window, operand 0']
    %7 = vsyncpa [#allocation4], 0
    %s8 = scalar_lea.sflag [#allocation4], 1
    %9 = vsyncpa %s8, 0
    %10 = vsyncpa [#allocation7], 0
    %s11 = scalar_lea.sflag [#allocation7], 1
    %12 = vsyncpa %s11, 0
    %13 = vsyncpa [#allocation5], 0
    %s14 = scalar_lea.sflag [#allocation5], 1
    %15 = vsyncpa %s14, 0
    loop: start=0, step=1, limit=6
    $region2: #{tpu_custom_call.1} parent=1 // loop_pre_header
      _
    $region3: #{tpu_custom_call.1} parent=1 // loop_header
      %s17 = sphi 0, %s21
      %p18 = scmp.ge.s32.totalorder %s17, 6
      %s24 = sphi 0, %s43
      %s25 = sphi 0, %s39
      %s26 = sphi 0, %s35
      %s27 = sphi 0, %s24
      %s28 = sphi 0, %s25
      %s29 = sphi 0, %s26
      %s30 = sphi 0, %s27
      %s31 = sphi 0, %s28
      %s32 = sphi 0, %s29
      %s48 = sphi 0, %s50
      %s51 = sphi 0, %s48
      %s52 = sphi 0, %s51
      %s68 = sphi 0, %s52
      %s76 = sphi 0, %s78
      %s79 = sphi 0, %s76
      %s80 = sphi 0, %s79
      %s96 = sphi 0, %s80
      %s104 = sphi 0, %s106
      %s107 = sphi 0, %s104
      %s108 = sphi 0, %s107
      %s124 = sphi 0, %s108
    $region4: #{tpu_custom_call.1} parent=1 // loop_header_branch
      %20 = sbr.rel (%p18) target = $region8
    $region5: #{tpu_custom_call.1} parent=1 // loop_body
      %s22 = ssub.s32 %s17, 1
      %s23 = ssub.s32 %s17, 2
      %s33 = sadd.s32 1, %s26
      %p34 = scmp.ge.s32.totalorder %s33, 2
      %s35 = scalar_select %p34, 0, %s33
      %s36 = sadd.s32 1, %s25
      %s37 = scalar_select %p34, %s36, %s25
      %p38 = scmp.ge.s32.totalorder %s37, 1
      %s39 = scalar_select %p38, 0, %s37
      %s40 = sadd.s32 1, %s24
      %s41 = scalar_select %p38, %s40, %s24
      %p42 = scmp.ge.s32.totalorder %s41, 2
      %s43 = scalar_select %p42, 0, %s41
      %s44 = ssub.s32 %s24, %s43
      %s45 = ssub.s32 %s26, %s35
      %s46 = sor.u32 %s44, %s45
      %p47 = scmp.eq.s32.totalorder %s46, 0
      %s49 = sadd.s32 %s48, 1
      %s50 = scalar_select %p47, %s48, %s49
      %p53 = pneg %p47
      %p54 = scmp.eq.s32.totalorder %s17, 3
      %p55 = por %p53, %p54
      %p56 = scmp.ne.s32.totalorder %s48, %s51
      %p57 = scmp.eq.s32.totalorder %s17, 0
      %p58 = por %p56, %p57
      %p59 = scmp.ne.s32.totalorder %s48, %s51
      %p60 = scmp.eq.s32.totalorder %s22, 3
      %p61 = por %p59, %p60
      %p62 = scmp.ne.s32.totalorder %s51, %s52
      %p63 = scmp.eq.s32.totalorder %s22, 0
      %p64 = por %p62, %p63
      %p65 = scmp.ne.s32.totalorder %s51, %s52
      %p66 = scmp.eq.s32.totalorder %s23, 3
      %p67 = por %p65, %p66
      %p69 = scmp.ne.s32.totalorder %s52, %s68
      %p70 = scmp.eq.s32.totalorder %s23, 0
      %p71 = por %p69, %p70
      %s72 = ssub.s32 %s26, %s35
      %s73 = ssub.s32 %s25, %s39
      %s74 = sor.u32 %s72, %s73
      %p75 = scmp.eq.s32.totalorder %s74, 0
      %s77 = sadd.s32 %s76, 1
      %s78 = scalar_select %p75, %s76, %s77
      %p81 = pneg %p75
      %p82 = scmp.eq.s32.totalorder %s17, 3
      %p83 = por %p81, %p82
      %p84 = scmp.ne.s32.totalorder %s76, %s79
      %p85 = scmp.eq.s32.totalorder %s17, 0
      %p86 = por %p84, %p85
      %p87 = scmp.ne.s32.totalorder %s76, %s79
      %p88 = scmp.eq.s32.totalorder %s22, 3
      %p89 = por %p87, %p88
      %p90 = scmp.ne.s32.totalorder %s79, %s80
      %p91 = scmp.eq.s32.totalorder %s22, 0
      %p92 = por %p90, %p91
      %p93 = scmp.ne.s32.totalorder %s79, %s80
      %p94 = scmp.eq.s32.totalorder %s23, 3
      %p95 = por %p93, %p94
      %p97 = scmp.ne.s32.totalorder %s80, %s96
      %p98 = scmp.eq.s32.totalorder %s23, 0
      %p99 = por %p97, %p98
      %s100 = ssub.s32 %s24, %s43
      %s101 = ssub.s32 %s25, %s39
      %s102 = sor.u32 %s100, %s101
      %p103 = scmp.eq.s32.totalorder %s102, 0
      %s105 = sadd.s32 %s104, 1
      %s106 = scalar_select %p103, %s104, %s105
      %p109 = pneg %p103
      %p110 = scmp.eq.s32.totalorder %s17, 3
      %p111 = por %p109, %p110
      %p112 = scmp.ne.s32.totalorder %s104, %s107
      %p113 = scmp.eq.s32.totalorder %s17, 0
      %p114 = por %p112, %p113
      %p115 = scmp.ne.s32.totalorder %s104, %s107
      %p116 = scmp.eq.s32.totalorder %s22, 3
      %p117 = por %p115, %p116
      %p118 = scmp.ne.s32.totalorder %s107, %s108
      %p119 = scmp.eq.s32.totalorder %s22, 0
      %p120 = por %p118, %p119
      %p121 = scmp.ne.s32.totalorder %s107, %s108
      %p122 = scmp.eq.s32.totalorder %s23, 3
      %p123 = por %p121, %p122
      %p125 = scmp.ne.s32.totalorder %s108, %s124
      %p126 = scmp.eq.s32.totalorder %s23, 0
      %p127 = por %p125, %p126
      %p128 = scmp.le.s32.totalorder 1, %s17
      %p129 = scmp.lt.s32.totalorder %s17, 5
      %p130 = pnand %p128, %p129
      %p131 = pneg %p130
      // Predicated region
      $region9: #{tpu_custom_call.1} parent=5 // pred_check
        _
      $region10: #{tpu_custom_call.1} parent=5 // pred_check_branch
        %133 = sbr.rel (%p130) target = $region12
      $region11: #{tpu_custom_call.1} parent=5 // pred_region
        %s134 = ssub.s32 %s17, 1
      $region12: #{tpu_custom_call.1} parent=5 // pred_fallthru
        _
      %p135 = scmp.lt.s32.totalorder %s17, 4
      // Predicated region
      $region13: #{tpu_custom_call.1} parent=5 // pred_check
        %p136 = pneg %p135
      $region14: #{tpu_custom_call.1} parent=5 // pred_check_branch
        %138 = sbr.rel (%p136) target = $region16
      $region15: #{tpu_custom_call.1} parent=5 // pred_region
        // Predicated region
        $region17: #{tpu_custom_call.1} parent=15 // pred_check
          %p139 = pneg %p58
        $region18: #{tpu_custom_call.1} parent=15 // pred_check_branch
          %141 = sbr.rel (%p139) target = $region20
        $region19: #{tpu_custom_call.1} parent=15 // pred_region
          %s142 = sand.u32 %s48, 1
          %s143 = scalar_lea.sflag [#allocation4], %s142
          %s144 = sand.u32 %s48, 1
          %s145 = smul.addr %s144, 128
          %s146 = scalar_lea.vmem [#allocation3], %s145
          %s147 = smul.u32 16, %s24
          %s149 = ssub.s32 2048, 2048
          %150 = vsyncadd %s143, %s149
          %s151 = smul.addr %s147, 2
          %s152 = sadd.s32 %s26, %s151
          %s153 = smul.addr %s152, 128
          %s154 = scalar_lea.hbm %s0, %s153
          %s155 = sshll.u32 %s146, 4
          %s156 = int_to_ptr.vmem [resolvable:$true] %s155
          %161 = dma.hbm_to_vmem [thread:$0]  %s154, 2048, %s156, %s143, 256, 128, 8
        $region20: #{tpu_custom_call.1} parent=15 // pred_fallthru
          _
        // Predicated region
        $region21: #{tpu_custom_call.1} parent=15 // pred_check
          %p162 = pneg %p86
        $region22: #{tpu_custom_call.1} parent=15 // pred_check_branch
          %164 = sbr.rel (%p162) target = $region24
        $region23: #{tpu_custom_call.1} parent=15 // pred_region
          %s165 = sand.u32 %s76, 1
          %s166 = scalar_lea.sflag [#allocation7], %s165
          %s167 = sand.u32 %s76, 1
          %s168 = smul.addr %s167, 128
          %s169 = scalar_lea.vmem [#allocation6], %s168
          %s170 = smul.u32 16, %s26
          %s172 = ssub.s32 2048, 2048
          %173 = vsyncadd %s166, %s172
          %s174 = sadd.s32 %s25, %s170
          %s175 = smul.addr %s174, 128
          %s176 = scalar_lea.hbm %s1, %s175
          %s177 = sshll.u32 %s169, 4
          %s178 = int_to_ptr.vmem [resolvable:$true] %s177
          %183 = dma.hbm_to_vmem [thread:$0]  %s176, 2048, %s178, %s166, 128, 128, 8
        $region24: #{tpu_custom_call.1} parent=15 // pred_fallthru
          _
      $region16: #{tpu_custom_call.1} parent=5 // pred_fallthru
        _
      %p184 = scmp.le.s32.totalorder 1, %s17
      %p185 = scmp.lt.s32.totalorder %s17, 5
      %p186 = pnand %p184, %p185
      %p187 = pneg %p186
      // Predicated region
      $region25: #{tpu_custom_call.1} parent=5 // pred_check
        _
      $region26: #{tpu_custom_call.1} parent=5 // pred_check_branch
        %189 = sbr.rel (%p186) target = $region28
      $region27: #{tpu_custom_call.1} parent=5 // pred_region
        %s190 = ssub.s32 %s17, 1
        %s191 = sand.u32 %s51, 1
        %s192 = scalar_lea.sflag [#allocation4], %s191
        %s193 = sand.u32 %s51, 1
        %s194 = smul.addr %s193, 128
        %s195 = scalar_lea.vmem [#allocation3], %s194
        // Predicated region
        $region29: #{tpu_custom_call.1} parent=27 // pred_check
          %p196 = pneg %p64
        $region30: #{tpu_custom_call.1} parent=27 // pred_check_branch
          %198 = sbr.rel (%p196) target = $region32
        $region31: #{tpu_custom_call.1} parent=27 // pred_region
          %199 = dma.done %s192, 2048
        $region32: #{tpu_custom_call.1} parent=27 // pred_fallthru
          _
        %s200 = sand.u32 %s79, 1
        %s201 = scalar_lea.sflag [#allocation7], %s200
        %s202 = sand.u32 %s79, 1
        %s203 = smul.addr %s202, 128
        %s204 = scalar_lea.vmem [#allocation6], %s203
        // Predicated region
        $region33: #{tpu_custom_call.1} parent=27 // pred_check
          %p205 = pneg %p92
        $region34: #{tpu_custom_call.1} parent=27 // pred_check_branch
          %207 = sbr.rel (%p205) target = $region36
        $region35: #{tpu_custom_call.1} parent=27 // pred_region
          %208 = dma.done %s201, 2048
        $region36: #{tpu_custom_call.1} parent=27 // pred_fallthru
          _
        %s209 = sand.u32 %s51, 1
        %s210 = scalar_lea.sflag [#allocation4], %s209
        %s211 = sand.u32 %s51, 1
        %s212 = smul.addr %s211, 128
        %s213 = scalar_lea.vmem [#allocation3], %s212
        %p214 = pneg %p64
        %p215 = pneg %p61
        %s216 = sand.u32 %s79, 1
        %s217 = scalar_lea.sflag [#allocation7], %s216
        %s218 = sand.u32 %s79, 1
        %s219 = smul.addr %s218, 128
        %s220 = scalar_lea.vmem [#allocation6], %s219
        %p221 = pneg %p92
        %p222 = pneg %p89
        %p223 = pneg %p120
        %p224 = pneg %p117
        %s225 = sand.u32 %s107, 1
        %s226 = scalar_lea.sflag [#allocation5], %s225
        %s227 = sand.u32 %s107, 1
        %s228 = smul.addr %s227, 128
        %s229 = scalar_lea.vmem [#allocation8], %s228
        %s230 = smul.u32 16, %s27
        %s231 = smul.u32 16, %s29
        %s232 = smul.u32 16, %s27
        %p233 = scmp.eq.s32.totalorder %s29, 0
        // Predicated region
        $region37: #{tpu_custom_call.1} parent=27 // pred_check
          %p234 = pneg %p233
        $region38: #{tpu_custom_call.1} parent=27 // pred_check_branch
          %236 = sbr.rel (%p234) target = $region40
        $region39: #{tpu_custom_call.1} parent=27 // pred_region
          %237 = vst [vmem:[#allocation2] sm:$0xff] 0.0
          %238 = vst [vmem:[#allocation2 + $0x8] sm:$0xff] 0.0
          %239 = vst [vmem:[#allocation2 + $0x10] sm:$0xff] 0.0
          %240 = vst [vmem:[#allocation2 + $0x18] sm:$0xff] 0.0
          %241 = vst [vmem:[#allocation2 + $0x20] sm:$0xff] 0.0
          %242 = vst [vmem:[#allocation2 + $0x28] sm:$0xff] 0.0
          %243 = vst [vmem:[#allocation2 + $0x30] sm:$0xff] 0.0
          %244 = vst [vmem:[#allocation2 + $0x38] sm:$0xff] 0.0
          %245 = vst [vmem:[#allocation2 + $0x40] sm:$0xff] 0.0
          %246 = vst [vmem:[#allocation2 + $0x48] sm:$0xff] 0.0
          %247 = vst [vmem:[#allocation2 + $0x50] sm:$0xff] 0.0
          %248 = vst [vmem:[#allocation2 + $0x58] sm:$0xff] 0.0
          %249 = vst [vmem:[#allocation2 + $0x60] sm:$0xff] 0.0
          %250 = vst [vmem:[#allocation2 + $0x68] sm:$0xff] 0.0
          %251 = vst [vmem:[#allocation2 + $0x70] sm:$0xff] 0.0
          %252 = vst [vmem:[#allocation2 + $0x78] sm:$0xff] 0.0
        $region40: #{tpu_custom_call.1} parent=27 // pred_fallthru
          _
        %v253 = vld [vmem:[#allocation2] sm:$0xff]
        %v254 = vld [vmem:[#allocation2 + $0x8] sm:$0xff]
        %v255 = vld [vmem:[#allocation2 + $0x10] sm:$0xff]
        %v256 = vld [vmem:[#allocation2 + $0x18] sm:$0xff]
        %v257 = vld [vmem:[#allocation2 + $0x20] sm:$0xff]
        %v258 = vld [vmem:[#allocation2 + $0x28] sm:$0xff]
        %v259 = vld [vmem:[#allocation2 + $0x30] sm:$0xff]
        %v260 = vld [vmem:[#allocation2 + $0x38] sm:$0xff]
        %v261 = vld [vmem:[#allocation2 + $0x40] sm:$0xff]
        %v262 = vld [vmem:[#allocation2 + $0x48] sm:$0xff]
        %v263 = vld [vmem:[#allocation2 + $0x50] sm:$0xff]
        %v264 = vld [vmem:[#allocation2 + $0x58] sm:$0xff]
        %v265 = vld [vmem:[#allocation2 + $0x60] sm:$0xff]
        %v266 = vld [vmem:[#allocation2 + $0x68] sm:$0xff]
        %v267 = vld [vmem:[#allocation2 + $0x70] sm:$0xff]
        %v268 = vld [vmem:[#allocation2 + $0x78] sm:$0xff]
        %v269 = vld [vmem:[%s195] sm:$0xff]
        %v270 = vld [vmem:[%s195 + $0x8] sm:$0xff]
        %v271 = vld [vmem:[%s195 + $0x10] sm:$0xff]
        %v272 = vld [vmem:[%s195 + $0x18] sm:$0xff]
        %v273 = vld [vmem:[%s195 + $0x20] sm:$0xff]
        %v274 = vld [vmem:[%s195 + $0x28] sm:$0xff]
        %v275 = vld [vmem:[%s195 + $0x30] sm:$0xff]
        %v276 = vld [vmem:[%s195 + $0x38] sm:$0xff]
        %v277 = vld [vmem:[%s195 + $0x40] sm:$0xff]
        %v278 = vld [vmem:[%s195 + $0x48] sm:$0xff]
        %v279 = vld [vmem:[%s195 + $0x50] sm:$0xff]
        %v280 = vld [vmem:[%s195 + $0x58] sm:$0xff]
        %v281 = vld [vmem:[%s195 + $0x60] sm:$0xff]
        %v282 = vld [vmem:[%s195 + $0x68] sm:$0xff]
        %v283 = vld [vmem:[%s195 + $0x70] sm:$0xff]
        %v284 = vld [vmem:[%s195 + $0x78] sm:$0xff]
        %v285 = vld [vmem:[%s204] sm:$0xff]
        %v286 = vld [vmem:[%s204 + $0x8] sm:$0xff]
        %v287 = vld [vmem:[%s204 + $0x10] sm:$0xff]
        %v288 = vld [vmem:[%s204 + $0x18] sm:$0xff]
        %v289 = vld [vmem:[%s204 + $0x20] sm:$0xff]
        %v290 = vld [vmem:[%s204 + $0x28] sm:$0xff]
        %v291 = vld [vmem:[%s204 + $0x30] sm:$0xff]
        %v292 = vld [vmem:[%s204 + $0x38] sm:$0xff]
        %v293 = vld [vmem:[%s204 + $0x40] sm:$0xff]
        %v294 = vld [vmem:[%s204 + $0x48] sm:$0xff]
        %v295 = vld [vmem:[%s204 + $0x50] sm:$0xff]
        %v296 = vld [vmem:[%s204 + $0x58] sm:$0xff]
        %v297 = vld [vmem:[%s204 + $0x60] sm:$0xff]
        %v298 = vld [vmem:[%s204 + $0x68] sm:$0xff]
        %v299 = vld [vmem:[%s204 + $0x70] sm:$0xff]
        %v300 = vld [vmem:[%s204 + $0x78] sm:$0xff]
        %301 = vmatprep.subr.mxu0 0.0
        %302 = vmatpush1.msra.mxu0 %v285
        %303 = vmatprep.subr.mxu0 0.0
        %304 = vmatpush1.msra.mxu0 %v286
        %305 = vmatprep.subr.mxu0 0.0
        %306 = vmatpush1.msra.mxu0 %v287
        %307 = vmatprep.subr.mxu0 0.0
        %308 = vmatpush1.msra.mxu0 %v288
        %309 = vmatprep.subr.mxu0 0.0
        %310 = vmatpush1.msra.mxu0 %v289
        %311 = vmatprep.subr.mxu0 0.0
        %312 = vmatpush1.msra.mxu0 %v290
        %313 = vmatprep.subr.mxu0 0.0
        %314 = vmatpush1.msra.mxu0 %v291
        %315 = vmatprep.subr.mxu0 0.0
        %316 = vmatpush1.msra.mxu0 %v292
        %317 = vmatprep.subr.mxu0 0.0
        %318 = vmatpush1.msra.mxu0 %v293
        %319 = vmatprep.subr.mxu0 0.0
        %320 = vmatpush1.msra.mxu0 %v294
        %321 = vmatprep.subr.mxu0 0.0
        %322 = vmatpush1.msra.mxu0 %v295
        %323 = vmatprep.subr.mxu0 0.0
        %324 = vmatpush1.msra.mxu0 %v296
        %325 = vmatprep.subr.mxu0 0.0
        %326 = vmatpush1.msra.mxu0 %v297
        %327 = vmatprep.subr.mxu0 0.0
        %328 = vmatpush1.msra.mxu0 %v298
        %329 = vmatprep.subr.mxu0 0.0
        %330 = vmatpush1.msra.mxu0 %v299
        %331 = vmatprep.subr.mxu0 0.0
        %332 = vmatpush1.msra.mxu0 %v300
        %333 = vmatprep.subr.mxu0 0.0
        %334 = vmatpush1.msra.mxu0 0.0
        %335 = vmatprep.subr.mxu0 0.0
        %336 = vmatpush1.msra.mxu0 0.0
        %337 = vmatprep.subr.mxu0 0.0
        %338 = vmatpush1.msra.mxu0 0.0
        %339 = vmatprep.subr.mxu0 0.0
        %340 = vmatpush1.msra.mxu0 0.0
        %341 = vmatprep.subr.mxu0 0.0
        %342 = vmatpush1.msra.mxu0 0.0
        %343 = vmatprep.subr.mxu0 0.0
        %344 = vmatpush1.msra.mxu0 0.0
        %345 = vmatprep.subr.mxu0 0.0
        %346 = vmatpush1.msra.mxu0 0.0
        %347 = vmatprep.subr.mxu0 0.0
        %348 = vmatpush1.msra.mxu0 0.0
        %349 = vmatprep.subr.mxu0 0.0
        %350 = vmatpush1.msra.mxu0 0.0
        %351 = vmatprep.subr.mxu0 0.0
        %352 = vmatpush1.msra.mxu0 0.0
        %353 = vmatprep.subr.mxu0 0.0
        %354 = vmatpush1.msra.mxu0 0.0
        %355 = vmatprep.subr.mxu0 0.0
        %356 = vmatpush1.msra.mxu0 0.0
        %357 = vmatprep.subr.mxu0 0.0
        %358 = vmatpush1.msra.mxu0 0.0
        %359 = vmatprep.subr.mxu0 0.0
        %360 = vmatpush1.msra.mxu0 0.0
        %361 = vmatprep.subr.mxu0 0.0
        %362 = vmatpush1.msra.mxu0 0.0
        %363 = vmatprep.subr.mxu0 0.0
        %364 = vmatpush1.msra.mxu0 0.0
        %365 = vmatprep.mubr.f32.mxu0 0.0
        %366 = vmatmul.mubr.f32.gmra.mrb[0].mxu0 %v269
        %v367 = vpop.f32.mrb[0].mxu0
        %v368 = vadd.f32 0.0, %v367
        %v369 = vpop.f32.mrb[0].mxu0
        %370 = vmatprep.mubr.f32.mxu0 0.0
        %371 = vmatmul.mubr.f32.gmra.mrb[0].mxu0 %v270
        %v372 = vpop.f32.mrb[0].mxu0
        %v373 = vadd.f32 0.0, %v372
        %v374 = vpop.f32.mrb[0].mxu0
        %375 = vmatprep.mubr.f32.mxu0 0.0
        %376 = vmatmul.mubr.f32.gmra.mrb[0].mxu0 %v271
        %v377 = vpop.f32.mrb[0].mxu0
        %v378 = vadd.f32 0.0, %v377
        %v379 = vpop.f32.mrb[0].mxu0
        %380 = vmatprep.mubr.f32.mxu0 0.0
        %381 = vmatmul.mubr.f32.gmra.mrb[0].mxu0 %v272
        %v382 = vpop.f32.mrb[0].mxu0
        %v383 = vadd.f32 0.0, %v382
        %v384 = vpop.f32.mrb[0].mxu0
        %385 = vmatprep.mubr.f32.mxu0 0.0
        %386 = vmatmul.mubr.f32.gmra.mrb[0].mxu0 %v273
        %v387 = vpop.f32.mrb[0].mxu0
        %v388 = vadd.f32 0.0, %v387
        %v389 = vpop.f32.mrb[0].mxu0
        %390 = vmatprep.mubr.f32.mxu0 0.0
        %391 = vmatmul.mubr.f32.gmra.mrb[0].mxu0 %v274
        %v392 = vpop.f32.mrb[0].mxu0
        %v393 = vadd.f32 0.0, %v392
        %v394 = vpop.f32.mrb[0].mxu0
        %395 = vmatprep.mubr.f32.mxu0 0.0
        %396 = vmatmul.mubr.f32.gmra.mrb[0].mxu0 %v275
        %v397 = vpop.f32.mrb[0].mxu0
        %v398 = vadd.f32 0.0, %v397
        %v399 = vpop.f32.mrb[0].mxu0
        %400 = vmatprep.mubr.f32.mxu0 0.0
        %401 = vmatmul.mubr.f32.gmra.mrb[0].mxu0 %v276
        %v402 = vpop.f32.mrb[0].mxu0
        %v403 = vadd.f32 0.0, %v402
        %v404 = vpop.f32.mrb[0].mxu0
        %405 = vmatprep.mubr.f32.mxu0 0.0
        %406 = vmatmul.mubr.f32.gmra.mrb[0].mxu0 %v277
        %v407 = vpop.f32.mrb[0].mxu0
        %v408 = vadd.f32 0.0, %v407
        %v409 = vpop.f32.mrb[0].mxu0
        %410 = vmatprep.mubr.f32.mxu0 0.0
        %411 = vmatmul.mubr.f32.gmra.mrb[0].mxu0 %v278
        %v412 = vpop.f32.mrb[0].mxu0
        %v413 = vadd.f32 0.0, %v412
        %v414 = vpop.f32.mrb[0].mxu0
        %415 = vmatprep.mubr.f32.mxu0 0.0
        %416 = vmatmul.mubr.f32.gmra.mrb[0].mxu0 %v279
        %v417 = vpop.f32.mrb[0].mxu0
        %v418 = vadd.f32 0.0, %v417
        %v419 = vpop.f32.mrb[0].mxu0
        %420 = vmatprep.mubr.f32.mxu0 0.0
        %421 = vmatmul.mubr.f32.gmra.mrb[0].mxu0 %v280
        %v422 = vpop.f32.mrb[0].mxu0
        %v423 = vadd.f32 0.0, %v422
        %v424 = vpop.f32.mrb[0].mxu0
        %425 = vmatprep.mubr.f32.mxu0 0.0
        %426 = vmatmul.mubr.f32.gmra.mrb[0].mxu0 %v281
        %v427 = vpop.f32.mrb[0].mxu0
        %v428 = vadd.f32 0.0, %v427
        %v429 = vpop.f32.mrb[0].mxu0
        %430 = vmatprep.mubr.f32.mxu0 0.0
        %431 = vmatmul.mubr.f32.gmra.mrb[0].mxu0 %v282
        %v432 = vpop.f32.mrb[0].mxu0
        %v433 = vadd.f32 0.0, %v432
        %v434 = vpop.f32.mrb[0].mxu0
        %435 = vmatprep.mubr.f32.mxu0 0.0
        %436 = vmatmul.mubr.f32.gmra.mrb[0].mxu0 %v283
        %v437 = vpop.f32.mrb[0].mxu0
        %v438 = vadd.f32 0.0, %v437
        %v439 = vpop.f32.mrb[0].mxu0
        %440 = vmatprep.mubr.f32.mxu0 0.0
        %441 = vmatmul.mubr.f32.gmra.mrb[0].mxu0 %v284
        %v442 = vpop.f32.mrb[0].mxu0
        %v443 = vadd.f32 0.0, %v442
        %v444 = vpop.f32.mrb[0].mxu0
        %445 = vdwg.mxu0
        %v446 = vadd.f32 %v253, %v368
        %v447 = vadd.f32 %v254, %v373
        %v448 = vadd.f32 %v255, %v378
        %v449 = vadd.f32 %v256, %v383
        %v450 = vadd.f32 %v257, %v388
        %v451 = vadd.f32 %v258, %v393
        %v452 = vadd.f32 %v259, %v398
        %v453 = vadd.f32 %v260, %v403
        %v454 = vadd.f32 %v261, %v408
        %v455 = vadd.f32 %v262, %v413
        %v456 = vadd.f32 %v263, %v418
        %v457 = vadd.f32 %v264, %v423
        %v458 = vadd.f32 %v265, %v428
        %v459 = vadd.f32 %v266, %v433
        %v460 = vadd.f32 %v267, %v438
        %v461 = vadd.f32 %v268, %v443
        %462 = vst [vmem:[#allocation2] sm:$0xff] %v446
        %463 = vst [vmem:[#allocation2 + $0x8] sm:$0xff] %v447
        %464 = vst [vmem:[#allocation2 + $0x10] sm:$0xff] %v448
        %465 = vst [vmem:[#allocation2 + $0x18] sm:$0xff] %v449
        %466 = vst [vmem:[#allocation2 + $0x20] sm:$0xff] %v450
        %467 = vst [vmem:[#allocation2 + $0x28] sm:$0xff] %v451
        %468 = vst [vmem:[#allocation2 + $0x30] sm:$0xff] %v452
        %469 = vst [vmem:[#allocation2 + $0x38] sm:$0xff] %v453
        %470 = vst [vmem:[#allocation2 + $0x40] sm:$0xff] %v454
        %471 = vst [vmem:[#allocation2 + $0x48] sm:$0xff] %v455
        %472 = vst [vmem:[#allocation2 + $0x50] sm:$0xff] %v456
        %473 = vst [vmem:[#allocation2 + $0x58] sm:$0xff] %v457
        %474 = vst [vmem:[#allocation2 + $0x60] sm:$0xff] %v458
        %475 = vst [vmem:[#allocation2 + $0x68] sm:$0xff] %v459
        %476 = vst [vmem:[#allocation2 + $0x70] sm:$0xff] %v460
        %477 = vst [vmem:[#allocation2 + $0x78] sm:$0xff] %v461
        %p478 = scmp.eq.s32.totalorder %s29, 1
        // Predicated region
        $region41: #{tpu_custom_call.1} parent=27 // pred_check
          %p479 = pneg %p478
        $region42: #{tpu_custom_call.1} parent=27 // pred_check_branch
          %481 = sbr.rel (%p479) target = $region44
        $region43: #{tpu_custom_call.1} parent=27 // pred_region
          %v482 = vld [vmem:[#allocation2] sm:$0xff]
          %v483 = vld [vmem:[#allocation2 + $0x8] sm:$0xff]
          %v484 = vld [vmem:[#allocation2 + $0x10] sm:$0xff]
          %v485 = vld [vmem:[#allocation2 + $0x18] sm:$0xff]
          %v486 = vld [vmem:[#allocation2 + $0x20] sm:$0xff]
          %v487 = vld [vmem:[#allocation2 + $0x28] sm:$0xff]
          %v488 = vld [vmem:[#allocation2 + $0x30] sm:$0xff]
          %v489 = vld [vmem:[#allocation2 + $0x38] sm:$0xff]
          %v490 = vld [vmem:[#allocation2 + $0x40] sm:$0xff]
          %v491 = vld [vmem:[#allocation2 + $0x48] sm:$0xff]
          %v492 = vld [vmem:[#allocation2 + $0x50] sm:$0xff]
          %v493 = vld [vmem:[#allocation2 + $0x58] sm:$0xff]
          %v494 = vld [vmem:[#allocation2 + $0x60] sm:$0xff]
          %v495 = vld [vmem:[#allocation2 + $0x68] sm:$0xff]
          %v496 = vld [vmem:[#allocation2 + $0x70] sm:$0xff]
          %v497 = vld [vmem:[#allocation2 + $0x78] sm:$0xff]
          %498 = vst [vmem:[%s229] sm:$0xff] %v482
          %499 = vst [vmem:[%s229 + $0x8] sm:$0xff] %v483
          %500 = vst [vmem:[%s229 + $0x10] sm:$0xff] %v484
          %501 = vst [vmem:[%s229 + $0x18] sm:$0xff] %v485
          %502 = vst [vmem:[%s229 + $0x20] sm:$0xff] %v486
          %503 = vst [vmem:[%s229 + $0x28] sm:$0xff] %v487
          %504 = vst [vmem:[%s229 + $0x30] sm:$0xff] %v488
          %505 = vst [vmem:[%s229 + $0x38] sm:$0xff] %v489
          %506 = vst [vmem:[%s229 + $0x40] sm:$0xff] %v490
          %507 = vst [vmem:[%s229 + $0x48] sm:$0xff] %v491
          %508 = vst [vmem:[%s229 + $0x50] sm:$0xff] %v492
          %509 = vst [vmem:[%s229 + $0x58] sm:$0xff] %v493
          %510 = vst [vmem:[%s229 + $0x60] sm:$0xff] %v494
          %511 = vst [vmem:[%s229 + $0x68] sm:$0xff] %v495
          %512 = vst [vmem:[%s229 + $0x70] sm:$0xff] %v496
          %513 = vst [vmem:[%s229 + $0x78] sm:$0xff] %v497
        $region44: #{tpu_custom_call.1} parent=27 // pred_fallthru
          _
        %s514 = sand.u32 %s107, 1
        %s515 = scalar_lea.sflag [#allocation5], %s514
        %s516 = sand.u32 %s107, 1
        %s517 = smul.addr %s516, 128
        %s518 = scalar_lea.vmem [#allocation8], %s517
        // Predicated region
        $region45: #{tpu_custom_call.1} parent=27 // pred_check
          %p519 = pneg %p117
        $region46: #{tpu_custom_call.1} parent=27 // pred_check_branch
          %521 = sbr.rel (%p519) target = $region48
        $region47: #{tpu_custom_call.1} parent=27 // pred_region
          %s522 = smul.u32 16, %s27
          %s524 = ssub.s32 2048, 2048
          %525 = vsyncadd %s515, %s524
          %s526 = sadd.s32 %s28, %s522
          %s527 = smul.addr %s526, 128
          %s528 = scalar_lea.hbm %s2, %s527
          %s529 = sshll.u32 %s518, 4
          %s530 = int_to_ptr.vmem [resolvable:$true] %s529
          %535 = dma.vmem_to_hbm [thread:$0]  %s530, 2048, %s528, %s515, 128, 128, 8
        $region48: #{tpu_custom_call.1} parent=27 // pred_fallthru
          _
      $region28: #{tpu_custom_call.1} parent=5 // pred_fallthru
        _
      %p536 = scmp.le.s32.totalorder 2, %s17
      // Predicated region
      $region49: #{tpu_custom_call.1} parent=5 // pred_check
        %p537 = pneg %p536
      $region50: #{tpu_custom_call.1} parent=5 // pred_check_branch
        %539 = sbr.rel (%p537) target = $region52
      $region51: #{tpu_custom_call.1} parent=5 // pred_region
        %s540 = ssub.s32 %s17, 2
        // Predicated region
        $region53: #{tpu_custom_call.1} parent=51 // pred_check
          %p541 = pneg %p123
        $region54: #{tpu_custom_call.1} parent=51 // pred_check_branch
          %543 = sbr.rel (%p541) target = $region56
        $region55: #{tpu_custom_call.1} parent=51 // pred_region
          %s544 = sand.u32 %s108, 1
          %s545 = scalar_lea.sflag [#allocation5], %s544
          %s546 = sand.u32 %s108, 1
          %s547 = smul.addr %s546, 128
          %s548 = scalar_lea.vmem [#allocation8], %s547
          %549 = dma.done %s545, 2048
        $region56: #{tpu_custom_call.1} parent=51 // pred_fallthru
          _
      $region52: #{tpu_custom_call.1} parent=5 // pred_fallthru
        _
    $region6: #{tpu_custom_call.1} parent=1 // loop_footer
      %s21 = sadd.s32 1, %s17
    $region7: #{tpu_custom_call.1} parent=1 // loop_footer_branch
      %16 = sbr.rel target = $region3
    $region8: #{tpu_custom_call.1} parent=1 // loop_exit
      _
    %550 = vsyncpa [#allocation4], 1
    %s551 = scalar_lea.sflag [#allocation4], 1
    %552 = vsyncpa %s551, 1
    %553 = vsyncpa [#allocation7], 1
    %s554 = scalar_lea.sflag [#allocation7], 1
    %555 = vsyncpa %s554, 1
    %556 = vsyncpa [#allocation5], 1
    %s557 = scalar_lea.sflag [#allocation5], 1
    %558 = vsyncpa %s557, 1

</llo_original>
